<compile_context>
chip_gen: v7x
topology: tpu7x:2x2x1
jax: 0.10.0
libtpu: 0.0.40
codegen_flags: <defaults>
</compile_context>

<pallas_src>
import functools
import math

import jax
import jax.numpy as jnp
from jax import lax
from jax.experimental import pallas as pl
from jax.experimental.pallas import tpu as pltpu

HIDDEN = 32


# ----------------------------- kernels ------------------------------------ #
def _gru_recurrence(x2d_ref, wih_ref, whh_ref, brz_ref, bhn_ref, xg_ref, *, T, B, H):
    """Shared GRU recurrence. Returns final hidden state (B, H) in f32.

    x2d_ref: (T*B, E) time-major flattened input
    wih_ref: (E, 3H)   whh_ref: (H, 3H)
    brz_ref: (1, 3H)   b_ih with b_hh[:2H] folded in (r/z gates)
    bhn_ref: (1, H)    b_hh for the n gate (must be scaled by r)
    xg_ref : VMEM scratch (T*B, 3H)
    """
    # Hoisted input projection: one big MXU matmul, biases folded in once.
    xg_ref[...] = (
        jnp.dot(x2d_ref[...], wih_ref[...], preferred_element_type=jnp.float32)
        + brz_ref[...]
    )

    whh = whh_ref[...]                               # loop-invariant (H, 3H)
    bhn = jnp.broadcast_to(bhn_ref[...], (B, H))     # hoisted broadcast

    def step(t, h):
        start = pl.multiple_of(t * B, B)             # sublane-aligned (B multiple of 8)
        xg = xg_ref[pl.ds(start, B), :]              # (B, 3H) precomputed gates
        hg = jnp.dot(h, whh, preferred_element_type=jnp.float32)   # (B, 3H)
        rz = jax.nn.sigmoid(xg[:, : 2 * H] + hg[:, : 2 * H])       # fused r|z
        r = rz[:, :H]
        z = rz[:, H:]
        n = jnp.tanh(xg[:, 2 * H:] + r * (hg[:, 2 * H:] + bhn))
        return (1.0 - z) * n + z * h

    # Full unroll (small static T) so EUP/VPU gate math overlaps the MXU matmul.
    return lax.fori_loop(0, T, step, jnp.zeros((B, H), jnp.float32), unroll=True)


def gru_kernel(x2d_ref, wih_ref, whh_ref, brz_ref, bhn_ref, h_ref, xg_ref, *, T, B):
    H = h_ref.shape[1]
    h_ref[...] = _gru_recurrence(
        x2d_ref, wih_ref, whh_ref, brz_ref, bhn_ref, xg_ref, T=T, B=B, H=H
    )


def gru_fc_kernel(x2d_ref, wih_ref, whh_ref, brz_ref, bhn_ref, wfc_ref, bfc_ref,
                  prob_ref, xg_ref, *, T, B):
    """Recurrence + fused Linear head epilogue: prob = h_T @ W_fc^T + b_fc."""
    H = wfc_ref.shape[0]
    h = _gru_recurrence(
        x2d_ref, wih_ref, whh_ref, brz_ref, bhn_ref, xg_ref, T=T, B=B, H=H
    )
    prob_ref[...] = (
        jnp.dot(h, wfc_ref[...], preferred_element_type=jnp.float32) + bfc_ref[...]
    )


# ----------------------------- wrapper ------------------------------------ #
def gru_forward(x, params, is_fc=False):
    """Mirrors GRU.forward: returns h_n (1, B, H) or fc(h_n) (1, B, spot_size)."""
    B, T, E = x.shape
    H = HIDDEN

    # Pad batch to a multiple of 8 so vreg sublanes / MXU rows are filled.
    B_pad = ((B + 7) // 8) * 8
    x_p = jnp.pad(x.astype(jnp.float32), ((0, B_pad - B), (0, 0), (0, 0)))
    # time-major, flattened: rows [t*B_pad : (t+1)*B_pad] belong to timestep t
    x2d = jnp.transpose(x_p, (1, 0, 2)).reshape(T * B_pad, E)

    vmem = pl.BlockSpec(memory_space=pltpu.MemorySpace.VMEM)
    scratch = [pltpu.VMEM((T * B_pad, 3 * H), jnp.float32)]

    if not is_fc:
        h = pl.pallas_call(
            functools.partial(gru_kernel, T=T, B=B_pad),
            out_shape=jax.ShapeDtypeStruct((B_pad, H), jnp.float32),
            in_specs=[vmem] * 5,
            out_specs=vmem,
            scratch_shapes=scratch,
        )(x2d, params["w_ih_t"], params["w_hh_t"], params["b_rz"], params["b_hn"])
        return h[None, :B, :]                       # (1, B, H) like torch h_n

    S = params["w_fc_t"].shape[1]
    prob = pl.pallas_call(
        functools.partial(gru_fc_kernel, T=T, B=B_pad),
        out_shape=jax.ShapeDtypeStruct((B_pad, S), jnp.float32),
        in_specs=[vmem] * 7,
        out_specs=vmem,
        scratch_shapes=scratch,
    )(x2d, params["w_ih_t"], params["w_hh_t"], params["b_rz"], params["b_hn"],
      params["w_fc_t"], params["b_fc"])
    return prob[None, :B, :]                        # (1, B, spot_size)


# ----------------------- deterministic parameters -------------------------- #
def init_raw_params(key, emb_size, hidden, spot_size):
    # torch.nn.GRU / Linear init: U(-1/sqrt(hidden), 1/sqrt(hidden))
    bound = 1.0 / math.sqrt(hidden)
    ks = jax.random.split(key, 6)
    return {
        "w_ih": jax.random.uniform(ks[0], (3 * hidden, emb_size), jnp.float32, -bound, bound),
        "w_hh": jax.random.uniform(ks[1], (3 * hidden, hidden), jnp.float32, -bound, bound),
        "b_ih": jax.random.uniform(ks[2], (3 * hidden,), jnp.float32, -bound, bound),
        "b_hh": jax.random.uniform(ks[3], (3 * hidden,), jnp.float32, -bound, bound),
        "w_fc": jax.random.uniform(ks[4], (spot_size, hidden), jnp.float32, -bound, bound),
        "b_fc": jax.random.uniform(ks[5], (spot_size,), jnp.float32, -bound, bound),
    }


def pack_params(raw, hidden):
    """Kernel-side layout: transposed weights + folded biases."""
    H = hidden
    b_ih, b_hh = raw["b_ih"], raw["b_hh"]
    # fold b_ih fully, plus the r/z part of b_hh (n-gate part must stay separate)
    b_rz = b_ih + jnp.concatenate([b_hh[: 2 * H], jnp.zeros((H,), jnp.float32)])
    return {
        "w_ih_t": raw["w_ih"].T,            # (E, 3H)
        "w_hh_t": raw["w_hh"].T,            # (H, 3H)
        "b_rz": b_rz[None, :],              # (1, 3H)
        "b_hn": b_hh[None, 2 * H:],         # (1, H)
        "w_fc_t": raw["w_fc"].T,            # (H, S)
        "b_fc": raw["b_fc"][None, :],       # (1, S)
    }


# ------------------------------ reference ---------------------------------- #
def gru_forward_ref(x, raw, is_fc=False):
    """Pure-JAX replica of torch.nn.GRU(batch_first=True) + optional Linear."""
    B, T, E = x.shape
    H = HIDDEN
    w_ih_t, w_hh_t = raw["w_ih"].T, raw["w_hh"].T
    b_ih, b_hh = raw["b_ih"][None, :], raw["b_hh"][None, :]
    h = jnp.zeros((B, H), jnp.float32)
    for t in range(T):
        xg = x[:, t, :] @ w_ih_t + b_ih
        hg = h @ w_hh_t + b_hh
        r = jax.nn.sigmoid(xg[:, :H] + hg[:, :H])
        z = jax.nn.sigmoid(xg[:, H:2 * H] + hg[:, H:2 * H])
        n = jnp.tanh(xg[:, 2 * H:] + r * hg[:, 2 * H:])
        h = (1.0 - z) * n + z * h
    if not is_fc:
        return h[None]
    return (h @ raw["w_fc"].T + raw["b_fc"][None, :])[None]


if __name__ == "__main__":
    # Synthetic sizes consistent with the module:
    #   spot_embedding W would be (spot_size, emb_size); only its dims matter.
    batch, seq, emb_size, spot_size = 2, 8, 64, 128

    key = jax.random.PRNGKey(0)
    k_x, k_p = jax.random.split(key)
    x = jax.random.normal(k_x, (batch, seq, emb_size), jnp.float32)
    raw = init_raw_params(k_p, emb_size, HIDDEN, spot_size)
    params = pack_params(raw, HIDDEN)

    # is_fc=False path (module default): returns h_n of shape (1, B, 32)
    h_n = jax.block_until_ready(gru_forward(x, params, is_fc=False))
    # is_fc=True path: returns prob of shape (1, B, spot_size)
    prob = jax.block_until_ready(gru_forward(x, params, is_fc=True))

    # sanity check vs pure-JAX reference (uses the raw, un-folded biases)
    h_ref = gru_forward_ref(x, raw, is_fc=False)
    p_ref = gru_forward_ref(x, raw, is_fc=True)
    assert h_n.shape == (1, batch, HIDDEN)
    assert prob.shape == (1, batch, spot_size)
    assert jnp.allclose(h_n, h_ref, atol=1e-5), "h_n mismatch"
    assert jnp.allclose(prob, p_ref, atol=1e-4), "fc output mismatch"

    print("KERNEL_OK")
</pallas_src>

<mosaic_0001>
module attributes {stable_mosaic.version = 11 : i64} {
  func.func @gru_kernel(%arg0: memref<64x64xf32, #tpu.memory_space<vmem>>, %arg1: memref<64x96xf32, #tpu.memory_space<vmem>>, %arg2: memref<32x96xf32, #tpu.memory_space<vmem>>, %arg3: memref<1x96xf32, #tpu.memory_space<vmem>>, %arg4: memref<1x32xf32, #tpu.memory_space<vmem>>, %arg5: memref<8x32xf32, #tpu.memory_space<vmem>>, %arg6: memref<64x96xf32, #tpu.memory_space<vmem>>) attributes {dimension_semantics = [], scalar_prefetch = 0 : i64, scratch_operands = 1 : i64, tpu.core_type = #tpu.core_type<tc>} {
    %c0 = arith.constant 0 : index
    %c0_0 = arith.constant 0 : index
    %0 = vector.load %arg0[%c0, %c0_0] : memref<64x64xf32, #tpu.memory_space<vmem>>, vector<64x64xf32>
    %c0_1 = arith.constant 0 : index
    %c0_2 = arith.constant 0 : index
    %1 = vector.load %arg1[%c0_1, %c0_2] : memref<64x96xf32, #tpu.memory_space<vmem>>, vector<64x96xf32>
    %cst = arith.constant dense<0.000000e+00> : vector<64x96xf32>
    %2 = tpu.matmul %0, %1, %cst {dimension_numbers = #tpu.dot_dimension_numbers<[1], [0], [0], [1], [0, 0, 1, 1], [], []>} : vector<64x64xf32>, vector<64x96xf32>, vector<64x96xf32> -> vector<64x96xf32>
    %c0_3 = arith.constant 0 : index
    %c0_4 = arith.constant 0 : index
    %3 = vector.load %arg3[%c0_3, %c0_4] : memref<1x96xf32, #tpu.memory_space<vmem>>, vector<1x96xf32>
    %4 = vector.broadcast %3 : vector<1x96xf32> to vector<64x96xf32>
    %5 = arith.addf %2, %4 : vector<64x96xf32>
    %c0_5 = arith.constant 0 : index
    %c0_6 = arith.constant 0 : index
    %6 = vector.load %arg6[%c0_5, %c0_6] : memref<64x96xf32, #tpu.memory_space<vmem>>, vector<64x96xf32>
    tpu.vector_store %arg6[%c0_5, %c0_6], %5 {strides = array<i32>} : memref<64x96xf32, #tpu.memory_space<vmem>>, vector<64x96xf32>,
    %c0_7 = arith.constant 0 : index
    %c0_8 = arith.constant 0 : index
    %7 = vector.load %arg2[%c0_7, %c0_8] : memref<32x96xf32, #tpu.memory_space<vmem>>, vector<32x96xf32>
    %c0_9 = arith.constant 0 : index
    %c0_10 = arith.constant 0 : index
    %8 = vector.load %arg4[%c0_9, %c0_10] : memref<1x32xf32, #tpu.memory_space<vmem>>, vector<1x32xf32>
    %9 = vector.shape_cast %8 : vector<1x32xf32> to vector<1x32xf32>
    %10 = vector.broadcast %9 : vector<1x32xf32> to vector<8x32xf32>
    %cst_11 = arith.constant 0.000000e+00 : f32
    %11 = vector.broadcast %cst_11 : f32 to vector<8x32xf32>
    %c0_i32 = arith.constant 0 : i32
    %c8_i32 = arith.constant 8 : i32
    %12 = arith.muli %c0_i32, %c8_i32 : i32
    %13 = tpu.assume_multiple %12, 8 : i32
    %14 = arith.index_cast %13 : i32 to index
    %c0_12 = arith.constant 0 : index
    %15 = vector.load %arg6[%14, %c0_12] : memref<64x96xf32, #tpu.memory_space<vmem>>, vector<8x96xf32>
    %cst_13 = arith.constant dense<0.000000e+00> : vector<8x96xf32>
    %16 = tpu.matmul %11, %7, %cst_13 {dimension_numbers = #tpu.dot_dimension_numbers<[1], [0], [0], [1], [0, 0, 1, 1], [], []>} : vector<8x32xf32>, vector<32x96xf32>, vector<8x96xf32> -> vector<8x96xf32>
    %17 = vector.extract_strided_slice %15 {offsets = [0, 0], sizes = [8, 64], strides = [1, 1]} : vector<8x96xf32> to vector<8x64xf32>
    %18 = vector.extract_strided_slice %16 {offsets = [0, 0], sizes = [8, 64], strides = [1, 1]} : vector<8x96xf32> to vector<8x64xf32>
    %19 = arith.addf %17, %18 : vector<8x64xf32>
    %20 = arith.negf %19 : vector<8x64xf32>
    %21 = math.exp %20 : vector<8x64xf32>
    %cst_14 = arith.constant 1.000000e+00 : f32
    %22 = vector.broadcast %cst_14 : f32 to vector<8x64xf32>
    %23 = arith.addf %22, %21 : vector<8x64xf32>
    %24 = arith.divf %22, %23 : vector<8x64xf32>
    %25 = vector.extract_strided_slice %24 {offsets = [0, 0], sizes = [8, 32], strides = [1, 1]} : vector<8x64xf32> to vector<8x32xf32>
    %26 = vector.extract_strided_slice %24 {offsets = [0, 32], sizes = [8, 32], strides = [1, 1]} : vector<8x64xf32> to vector<8x32xf32>
    %27 = vector.extract_strided_slice %15 {offsets = [0, 64], sizes = [8, 32], strides = [1, 1]} : vector<8x96xf32> to vector<8x32xf32>
    %28 = vector.extract_strided_slice %16 {offsets = [0, 64], sizes = [8, 32], strides = [1, 1]} : vector<8x96xf32> to vector<8x32xf32>
    %29 = arith.addf %28, %10 : vector<8x32xf32>
    %30 = arith.mulf %25, %29 : vector<8x32xf32>
    %31 = arith.addf %27, %30 : vector<8x32xf32>
    %32 = math.tanh %31 : vector<8x32xf32>
    %cst_15 = arith.constant 1.000000e+00 : f32
    %33 = vector.broadcast %cst_15 : f32 to vector<8x32xf32>
    %34 = arith.subf %33, %26 : vector<8x32xf32>
    %35 = arith.mulf %34, %32 : vector<8x32xf32>
    %36 = arith.mulf %26, %11 : vector<8x32xf32>
    %37 = arith.addf %35, %36 : vector<8x32xf32>
    %c1_i32 = arith.constant 1 : i32
    %c8_i32_16 = arith.constant 8 : i32
    %38 = arith.muli %c1_i32, %c8_i32_16 : i32
    %39 = tpu.assume_multiple %38, 8 : i32
    %40 = arith.index_cast %39 : i32 to index
    %c0_17 = arith.constant 0 : index
    %41 = vector.load %arg6[%40, %c0_17] : memref<64x96xf32, #tpu.memory_space<vmem>>, vector<8x96xf32>
    %cst_18 = arith.constant dense<0.000000e+00> : vector<8x96xf32>
    %42 = tpu.matmul %37, %7, %cst_18 {dimension_numbers = #tpu.dot_dimension_numbers<[1], [0], [0], [1], [0, 0, 1, 1], [], []>} : vector<8x32xf32>, vector<32x96xf32>, vector<8x96xf32> -> vector<8x96xf32>
    %43 = vector.extract_strided_slice %41 {offsets = [0, 0], sizes = [8, 64], strides = [1, 1]} : vector<8x96xf32> to vector<8x64xf32>
    %44 = vector.extract_strided_slice %42 {offsets = [0, 0], sizes = [8, 64], strides = [1, 1]} : vector<8x96xf32> to vector<8x64xf32>
    %45 = arith.addf %43, %44 : vector<8x64xf32>
    %46 = arith.negf %45 : vector<8x64xf32>
    %47 = math.exp %46 : vector<8x64xf32>
    %cst_19 = arith.constant 1.000000e+00 : f32
    %48 = vector.broadcast %cst_19 : f32 to vector<8x64xf32>
    %49 = arith.addf %48, %47 : vector<8x64xf32>
    %50 = arith.divf %48, %49 : vector<8x64xf32>
    %51 = vector.extract_strided_slice %50 {offsets = [0, 0], sizes = [8, 32], strides = [1, 1]} : vector<8x64xf32> to vector<8x32xf32>
    %52 = vector.extract_strided_slice %50 {offsets = [0, 32], sizes = [8, 32], strides = [1, 1]} : vector<8x64xf32> to vector<8x32xf32>
    %53 = vector.extract_strided_slice %41 {offsets = [0, 64], sizes = [8, 32], strides = [1, 1]} : vector<8x96xf32> to vector<8x32xf32>
    %54 = vector.extract_strided_slice %42 {offsets = [0, 64], sizes = [8, 32], strides = [1, 1]} : vector<8x96xf32> to vector<8x32xf32>
    %55 = arith.addf %54, %10 : vector<8x32xf32>
    %56 = arith.mulf %51, %55 : vector<8x32xf32>
    %57 = arith.addf %53, %56 : vector<8x32xf32>
    %58 = math.tanh %57 : vector<8x32xf32>
    %cst_20 = arith.constant 1.000000e+00 : f32
    %59 = vector.broadcast %cst_20 : f32 to vector<8x32xf32>
    %60 = arith.subf %59, %52 : vector<8x32xf32>
    %61 = arith.mulf %60, %58 : vector<8x32xf32>
    %62 = arith.mulf %52, %37 : vector<8x32xf32>
    %63 = arith.addf %61, %62 : vector<8x32xf32>
    %c2_i32 = arith.constant 2 : i32
    %c8_i32_21 = arith.constant 8 : i32
    %64 = arith.muli %c2_i32, %c8_i32_21 : i32
    %65 = tpu.assume_multiple %64, 8 : i32
    %66 = arith.index_cast %65 : i32 to index
    %c0_22 = arith.constant 0 : index
    %67 = vector.load %arg6[%66, %c0_22] : memref<64x96xf32, #tpu.memory_space<vmem>>, vector<8x96xf32>
    %cst_23 = arith.constant dense<0.000000e+00> : vector<8x96xf32>
    %68 = tpu.matmul %63, %7, %cst_23 {dimension_numbers = #tpu.dot_dimension_numbers<[1], [0], [0], [1], [0, 0, 1, 1], [], []>} : vector<8x32xf32>, vector<32x96xf32>, vector<8x96xf32> -> vector<8x96xf32>
    %69 = vector.extract_strided_slice %67 {offsets = [0, 0], sizes = [8, 64], strides = [1, 1]} : vector<8x96xf32> to vector<8x64xf32>
    %70 = vector.extract_strided_slice %68 {offsets = [0, 0], sizes = [8, 64], strides = [1, 1]} : vector<8x96xf32> to vector<8x64xf32>
    %71 = arith.addf %69, %70 : vector<8x64xf32>
    %72 = arith.negf %71 : vector<8x64xf32>
    %73 = math.exp %72 : vector<8x64xf32>
    %cst_24 = arith.constant 1.000000e+00 : f32
    %74 = vector.broadcast %cst_24 : f32 to vector<8x64xf32>
    %75 = arith.addf %74, %73 : vector<8x64xf32>
    %76 = arith.divf %74, %75 : vector<8x64xf32>
    %77 = vector.extract_strided_slice %76 {offsets = [0, 0], sizes = [8, 32], strides = [1, 1]} : vector<8x64xf32> to vector<8x32xf32>
    %78 = vector.extract_strided_slice %76 {offsets = [0, 32], sizes = [8, 32], strides = [1, 1]} : vector<8x64xf32> to vector<8x32xf32>
    %79 = vector.extract_strided_slice %67 {offsets = [0, 64], sizes = [8, 32], strides = [1, 1]} : vector<8x96xf32> to vector<8x32xf32>
    %80 = vector.extract_strided_slice %68 {offsets = [0, 64], sizes = [8, 32], strides = [1, 1]} : vector<8x96xf32> to vector<8x32xf32>
    %81 = arith.addf %80, %10 : vector<8x32xf32>
    %82 = arith.mulf %77, %81 : vector<8x32xf32>
    %83 = arith.addf %79, %82 : vector<8x32xf32>
    %84 = math.tanh %83 : vector<8x32xf32>
    %cst_25 = arith.constant 1.000000e+00 : f32
    %85 = vector.broadcast %cst_25 : f32 to vector<8x32xf32>
    %86 = arith.subf %85, %78 : vector<8x32xf32>
    %87 = arith.mulf %86, %84 : vector<8x32xf32>
    %88 = arith.mulf %78, %63 : vector<8x32xf32>
    %89 = arith.addf %87, %88 : vector<8x32xf32>
    %c3_i32 = arith.constant 3 : i32
    %c8_i32_26 = arith.constant 8 : i32
    %90 = arith.muli %c3_i32, %c8_i32_26 : i32
    %91 = tpu.assume_multiple %90, 8 : i32
    %92 = arith.index_cast %91 : i32 to index
    %c0_27 = arith.constant 0 : index
    %93 = vector.load %arg6[%92, %c0_27] : memref<64x96xf32, #tpu.memory_space<vmem>>, vector<8x96xf32>
    %cst_28 = arith.constant dense<0.000000e+00> : vector<8x96xf32>
    %94 = tpu.matmul %89, %7, %cst_28 {dimension_numbers = #tpu.dot_dimension_numbers<[1], [0], [0], [1], [0, 0, 1, 1], [], []>} : vector<8x32xf32>, vector<32x96xf32>, vector<8x96xf32> -> vector<8x96xf32>
    %95 = vector.extract_strided_slice %93 {offsets = [0, 0], sizes = [8, 64], strides = [1, 1]} : vector<8x96xf32> to vector<8x64xf32>
    %96 = vector.extract_strided_slice %94 {offsets = [0, 0], sizes = [8, 64], strides = [1, 1]} : vector<8x96xf32> to vector<8x64xf32>
    %97 = arith.addf %95, %96 : vector<8x64xf32>
    %98 = arith.negf %97 : vector<8x64xf32>
    %99 = math.exp %98 : vector<8x64xf32>
    %cst_29 = arith.constant 1.000000e+00 : f32
    %100 = vector.broadcast %cst_29 : f32 to vector<8x64xf32>
    %101 = arith.addf %100, %99 : vector<8x64xf32>
    %102 = arith.divf %100, %101 : vector<8x64xf32>
    %103 = vector.extract_strided_slice %102 {offsets = [0, 0], sizes = [8, 32], strides = [1, 1]} : vector<8x64xf32> to vector<8x32xf32>
    %104 = vector.extract_strided_slice %102 {offsets = [0, 32], sizes = [8, 32], strides = [1, 1]} : vector<8x64xf32> to vector<8x32xf32>
    %105 = vector.extract_strided_slice %93 {offsets = [0, 64], sizes = [8, 32], strides = [1, 1]} : vector<8x96xf32> to vector<8x32xf32>
    %106 = vector.extract_strided_slice %94 {offsets = [0, 64], sizes = [8, 32], strides = [1, 1]} : vector<8x96xf32> to vector<8x32xf32>
    %107 = arith.addf %106, %10 : vector<8x32xf32>
    %108 = arith.mulf %103, %107 : vector<8x32xf32>
    %109 = arith.addf %105, %108 : vector<8x32xf32>
    %110 = math.tanh %109 : vector<8x32xf32>
    %cst_30 = arith.constant 1.000000e+00 : f32
    %111 = vector.broadcast %cst_30 : f32 to vector<8x32xf32>
    %112 = arith.subf %111, %104 : vector<8x32xf32>
    %113 = arith.mulf %112, %110 : vector<8x32xf32>
    %114 = arith.mulf %104, %89 : vector<8x32xf32>
    %115 = arith.addf %113, %114 : vector<8x32xf32>
    %c4_i32 = arith.constant 4 : i32
    %c8_i32_31 = arith.constant 8 : i32
    %116 = arith.muli %c4_i32, %c8_i32_31 : i32
    %117 = tpu.assume_multiple %116, 8 : i32
    %118 = arith.index_cast %117 : i32 to index
    %c0_32 = arith.constant 0 : index
    %119 = vector.load %arg6[%118, %c0_32] : memref<64x96xf32, #tpu.memory_space<vmem>>, vector<8x96xf32>
    %cst_33 = arith.constant dense<0.000000e+00> : vector<8x96xf32>
    %120 = tpu.matmul %115, %7, %cst_33 {dimension_numbers = #tpu.dot_dimension_numbers<[1], [0], [0], [1], [0, 0, 1, 1], [], []>} : vector<8x32xf32>, vector<32x96xf32>, vector<8x96xf32> -> vector<8x96xf32>
    %121 = vector.extract_strided_slice %119 {offsets = [0, 0], sizes = [8, 64], strides = [1, 1]} : vector<8x96xf32> to vector<8x64xf32>
    %122 = vector.extract_strided_slice %120 {offsets = [0, 0], sizes = [8, 64], strides = [1, 1]} : vector<8x96xf32> to vector<8x64xf32>
    %123 = arith.addf %121, %122 : vector<8x64xf32>
    %124 = arith.negf %123 : vector<8x64xf32>
    %125 = math.exp %124 : vector<8x64xf32>
    %cst_34 = arith.constant 1.000000e+00 : f32
    %126 = vector.broadcast %cst_34 : f32 to vector<8x64xf32>
    %127 = arith.addf %126, %125 : vector<8x64xf32>
    %128 = arith.divf %126, %127 : vector<8x64xf32>
    %129 = vector.extract_strided_slice %128 {offsets = [0, 0], sizes = [8, 32], strides = [1, 1]} : vector<8x64xf32> to vector<8x32xf32>
    %130 = vector.extract_strided_slice %128 {offsets = [0, 32], sizes = [8, 32], strides = [1, 1]} : vector<8x64xf32> to vector<8x32xf32>
    %131 = vector.extract_strided_slice %119 {offsets = [0, 64], sizes = [8, 32], strides = [1, 1]} : vector<8x96xf32> to vector<8x32xf32>
    %132 = vector.extract_strided_slice %120 {offsets = [0, 64], sizes = [8, 32], strides = [1, 1]} : vector<8x96xf32> to vector<8x32xf32>
    %133 = arith.addf %132, %10 : vector<8x32xf32>
    %134 = arith.mulf %129, %133 : vector<8x32xf32>
    %135 = arith.addf %131, %134 : vector<8x32xf32>
    %136 = math.tanh %135 : vector<8x32xf32>
    %cst_35 = arith.constant 1.000000e+00 : f32
    %137 = vector.broadcast %cst_35 : f32 to vector<8x32xf32>
    %138 = arith.subf %137, %130 : vector<8x32xf32>
    %139 = arith.mulf %138, %136 : vector<8x32xf32>
    %140 = arith.mulf %130, %115 : vector<8x32xf32>
    %141 = arith.addf %139, %140 : vector<8x32xf32>
    %c5_i32 = arith.constant 5 : i32
    %c8_i32_36 = arith.constant 8 : i32
    %142 = arith.muli %c5_i32, %c8_i32_36 : i32
    %143 = tpu.assume_multiple %142, 8 : i32
    %144 = arith.index_cast %143 : i32 to index
    %c0_37 = arith.constant 0 : index
    %145 = vector.load %arg6[%144, %c0_37] : memref<64x96xf32, #tpu.memory_space<vmem>>, vector<8x96xf32>
    %cst_38 = arith.constant dense<0.000000e+00> : vector<8x96xf32>
    %146 = tpu.matmul %141, %7, %cst_38 {dimension_numbers = #tpu.dot_dimension_numbers<[1], [0], [0], [1], [0, 0, 1, 1], [], []>} : vector<8x32xf32>, vector<32x96xf32>, vector<8x96xf32> -> vector<8x96xf32>
    %147 = vector.extract_strided_slice %145 {offsets = [0, 0], sizes = [8, 64], strides = [1, 1]} : vector<8x96xf32> to vector<8x64xf32>
    %148 = vector.extract_strided_slice %146 {offsets = [0, 0], sizes = [8, 64], strides = [1, 1]} : vector<8x96xf32> to vector<8x64xf32>
    %149 = arith.addf %147, %148 : vector<8x64xf32>
    %150 = arith.negf %149 : vector<8x64xf32>
    %151 = math.exp %150 : vector<8x64xf32>
    %cst_39 = arith.constant 1.000000e+00 : f32
    %152 = vector.broadcast %cst_39 : f32 to vector<8x64xf32>
    %153 = arith.addf %152, %151 : vector<8x64xf32>
    %154 = arith.divf %152, %153 : vector<8x64xf32>
    %155 = vector.extract_strided_slice %154 {offsets = [0, 0], sizes = [8, 32], strides = [1, 1]} : vector<8x64xf32> to vector<8x32xf32>
    %156 = vector.extract_strided_slice %154 {offsets = [0, 32], sizes = [8, 32], strides = [1, 1]} : vector<8x64xf32> to vector<8x32xf32>
    %157 = vector.extract_strided_slice %145 {offsets = [0, 64], sizes = [8, 32], strides = [1, 1]} : vector<8x96xf32> to vector<8x32xf32>
    %158 = vector.extract_strided_slice %146 {offsets = [0, 64], sizes = [8, 32], strides = [1, 1]} : vector<8x96xf32> to vector<8x32xf32>
    %159 = arith.addf %158, %10 : vector<8x32xf32>
    %160 = arith.mulf %155, %159 : vector<8x32xf32>
    %161 = arith.addf %157, %160 : vector<8x32xf32>
    %162 = math.tanh %161 : vector<8x32xf32>
    %cst_40 = arith.constant 1.000000e+00 : f32
    %163 = vector.broadcast %cst_40 : f32 to vector<8x32xf32>
    %164 = arith.subf %163, %156 : vector<8x32xf32>
    %165 = arith.mulf %164, %162 : vector<8x32xf32>
    %166 = arith.mulf %156, %141 : vector<8x32xf32>
    %167 = arith.addf %165, %166 : vector<8x32xf32>
    %c6_i32 = arith.constant 6 : i32
    %c8_i32_41 = arith.constant 8 : i32
    %168 = arith.muli %c6_i32, %c8_i32_41 : i32
    %169 = tpu.assume_multiple %168, 8 : i32
    %170 = arith.index_cast %169 : i32 to index
    %c0_42 = arith.constant 0 : index
    %171 = vector.load %arg6[%170, %c0_42] : memref<64x96xf32, #tpu.memory_space<vmem>>, vector<8x96xf32>
    %cst_43 = arith.constant dense<0.000000e+00> : vector<8x96xf32>
    %172 = tpu.matmul %167, %7, %cst_43 {dimension_numbers = #tpu.dot_dimension_numbers<[1], [0], [0], [1], [0, 0, 1, 1], [], []>} : vector<8x32xf32>, vector<32x96xf32>, vector<8x96xf32> -> vector<8x96xf32>
    %173 = vector.extract_strided_slice %171 {offsets = [0, 0], sizes = [8, 64], strides = [1, 1]} : vector<8x96xf32> to vector<8x64xf32>
    %174 = vector.extract_strided_slice %172 {offsets = [0, 0], sizes = [8, 64], strides = [1, 1]} : vector<8x96xf32> to vector<8x64xf32>
    %175 = arith.addf %173, %174 : vector<8x64xf32>
    %176 = arith.negf %175 : vector<8x64xf32>
    %177 = math.exp %176 : vector<8x64xf32>
    %cst_44 = arith.constant 1.000000e+00 : f32
    %178 = vector.broadcast %cst_44 : f32 to vector<8x64xf32>
    %179 = arith.addf %178, %177 : vector<8x64xf32>
    %180 = arith.divf %178, %179 : vector<8x64xf32>
    %181 = vector.extract_strided_slice %180 {offsets = [0, 0], sizes = [8, 32], strides = [1, 1]} : vector<8x64xf32> to vector<8x32xf32>
    %182 = vector.extract_strided_slice %180 {offsets = [0, 32], sizes = [8, 32], strides = [1, 1]} : vector<8x64xf32> to vector<8x32xf32>
    %183 = vector.extract_strided_slice %171 {offsets = [0, 64], sizes = [8, 32], strides = [1, 1]} : vector<8x96xf32> to vector<8x32xf32>
    %184 = vector.extract_strided_slice %172 {offsets = [0, 64], sizes = [8, 32], strides = [1, 1]} : vector<8x96xf32> to vector<8x32xf32>
    %185 = arith.addf %184, %10 : vector<8x32xf32>
    %186 = arith.mulf %181, %185 : vector<8x32xf32>
    %187 = arith.addf %183, %186 : vector<8x32xf32>
    %188 = math.tanh %187 : vector<8x32xf32>
    %cst_45 = arith.constant 1.000000e+00 : f32
    %189 = vector.broadcast %cst_45 : f32 to vector<8x32xf32>
    %190 = arith.subf %189, %182 : vector<8x32xf32>
    %191 = arith.mulf %190, %188 : vector<8x32xf32>
    %192 = arith.mulf %182, %167 : vector<8x32xf32>
    %193 = arith.addf %191, %192 : vector<8x32xf32>
    %c7_i32 = arith.constant 7 : i32
    %c8_i32_46 = arith.constant 8 : i32
    %194 = arith.muli %c7_i32, %c8_i32_46 : i32
    %195 = tpu.assume_multiple %194, 8 : i32
    %196 = arith.index_cast %195 : i32 to index
    %c0_47 = arith.constant 0 : index
    %197 = vector.load %arg6[%196, %c0_47] : memref<64x96xf32, #tpu.memory_space<vmem>>, vector<8x96xf32>
    %cst_48 = arith.constant dense<0.000000e+00> : vector<8x96xf32>
    %198 = tpu.matmul %193, %7, %cst_48 {dimension_numbers = #tpu.dot_dimension_numbers<[1], [0], [0], [1], [0, 0, 1, 1], [], []>} : vector<8x32xf32>, vector<32x96xf32>, vector<8x96xf32> -> vector<8x96xf32>
    %199 = vector.extract_strided_slice %197 {offsets = [0, 0], sizes = [8, 64], strides = [1, 1]} : vector<8x96xf32> to vector<8x64xf32>
    %200 = vector.extract_strided_slice %198 {offsets = [0, 0], sizes = [8, 64], strides = [1, 1]} : vector<8x96xf32> to vector<8x64xf32>
    %201 = arith.addf %199, %200 : vector<8x64xf32>
    %202 = arith.negf %201 : vector<8x64xf32>
    %203 = math.exp %202 : vector<8x64xf32>
    %cst_49 = arith.constant 1.000000e+00 : f32
    %204 = vector.broadcast %cst_49 : f32 to vector<8x64xf32>
    %205 = arith.addf %204, %203 : vector<8x64xf32>
    %206 = arith.divf %204, %205 : vector<8x64xf32>
    %207 = vector.extract_strided_slice %206 {offsets = [0, 0], sizes = [8, 32], strides = [1, 1]} : vector<8x64xf32> to vector<8x32xf32>
    %208 = vector.extract_strided_slice %206 {offsets = [0, 32], sizes = [8, 32], strides = [1, 1]} : vector<8x64xf32> to vector<8x32xf32>
    %209 = vector.extract_strided_slice %197 {offsets = [0, 64], sizes = [8, 32], strides = [1, 1]} : vector<8x96xf32> to vector<8x32xf32>
    %210 = vector.extract_strided_slice %198 {offsets = [0, 64], sizes = [8, 32], strides = [1, 1]} : vector<8x96xf32> to vector<8x32xf32>
    %211 = arith.addf %210, %10 : vector<8x32xf32>
    %212 = arith.mulf %207, %211 : vector<8x32xf32>
    %213 = arith.addf %209, %212 : vector<8x32xf32>
    %214 = math.tanh %213 : vector<8x32xf32>
    %cst_50 = arith.constant 1.000000e+00 : f32
    %215 = vector.broadcast %cst_50 : f32 to vector<8x32xf32>
    %216 = arith.subf %215, %208 : vector<8x32xf32>
    %217 = arith.mulf %216, %214 : vector<8x32xf32>
    %218 = arith.mulf %208, %193 : vector<8x32xf32>
    %219 = arith.addf %217, %218 : vector<8x32xf32>
    %c8_i32_51 = arith.constant 8 : i32
    %c0_52 = arith.constant 0 : index
    %c0_53 = arith.constant 0 : index
    %220 = vector.load %arg5[%c0_52, %c0_53] : memref<8x32xf32, #tpu.memory_space<vmem>>, vector<8x32xf32>
    tpu.vector_store %arg5[%c0_52, %c0_53], %219 {strides = array<i32>} : memref<8x32xf32, #tpu.memory_space<vmem>>, vector<8x32xf32>,
    return
  }
}

</mosaic_0001>

<llo_original>
// kernel: tpu_custom_call.1
$region0: #{tpu_custom_call.1}
  #allocation0 [shape = 'u32[]', space=smem, size = 0x4, offset = 0x4, fixed_abs, tag = 'smem constant byte address 0x4 - core index']
  #allocation1 [shape = 'u32[144,128]{1,0:T(1,128)}', space=vmem, size = 0x12000, scoped, tag = 'internal scratch']
  #allocation2 [shape = 'f32[64,96]{1,0:T(8,128)}', space=vmem, size = 0x8000, scoped, tag = 'scratch operand']
  %s0 = inlined_call_operand.hbm [shape: f32[64,64], index: 0, kind: input, shape index: {}]
  %s1 = inlined_call_operand.hbm [shape: f32[64,96], index: 1, kind: input, shape index: {}]
  %s2 = inlined_call_operand.hbm [shape: f32[32,96], index: 2, kind: input, shape index: {}]
  %s3 = inlined_call_operand.vmem [shape: f32[1,96], index: 3, kind: input, shape index: {}]
  %s4 = inlined_call_operand.vmem [shape: f32[1,32], index: 4, kind: input, shape index: {}]
  %s5 = inlined_call_operand.hbm [shape: f32[8,32], index: 5, kind: output, shape index: {}]
  %s6 = sld [smem:[#allocation0]]
  $region42: #{tpu_custom_call.1} parent=0
    _
  %s8 = ssub.s32 1, %s6
  %s9 = scalar_select 0, %s8, %s6
  $region1: #{tpu_custom_call.1} parent=0
    #allocation3 [shape = 'u8[32768]{0}', space=vmem, size = 0x8000, scoped, tag = 'input window, operand 0, single buffered']
    #allocation4 [shape = 's32[1]{0}', space=sflag, size = 0x4, scoped, tag = 'scoped memory for tpu_custom_call.1']
    #allocation5 [shape = 's32[1]{0}', space=sflag, size = 0x4, scoped, tag = 'scoped memory for tpu_custom_call.1']
    #allocation6 [shape = 'u8[32768]{0}', space=vmem, size = 0x8000, scoped, tag = 'input window, operand 1, single buffered']
    #allocation7 [shape = 's32[1]{0}', space=sflag, size = 0x4, scoped, tag = 'scoped memory for tpu_custom_call.1']
    #allocation8 [shape = 'u8[16384]{0}', space=vmem, size = 0x4000, scoped, tag = 'input window, operand 2, single buffered']
    #allocation9 [shape = 'u8[4096]{0}', space=vmem, size = 0x1000, scoped, tag = 'output window, operand 0, single buffered']
    %10 = vsyncpa [#allocation4], 0
    %11 = vsyncpa [#allocation7], 0
    %12 = vsyncpa [#allocation5], 0
    // Predicated region
    $region2: #{tpu_custom_call.1} parent=1 // pred_check
      _
    $region3: #{tpu_custom_call.1} parent=1 // pred_check_branch
      %14 = sbr.rel (0) target = $region5
    $region4: #{tpu_custom_call.1} parent=1 // pred_region
      %s16 = ssub.s32 1024, 1024
      %17 = vsyncadd [#allocation4], %s16
      %s18 = sshll.u32 [#allocation3], 4
      %s19 = int_to_ptr.vmem [resolvable:$true] %s18
      %24 = dma.hbm_to_vmem [thread:$0]  %s0, 1024, %s19, [#allocation4], 128, 128, 8
    $region5: #{tpu_custom_call.1} parent=1 // pred_fallthru
      _
    // Predicated region
    $region6: #{tpu_custom_call.1} parent=1 // pred_check
      _
    $region7: #{tpu_custom_call.1} parent=1 // pred_check_branch
      %26 = sbr.rel (0) target = $region9
    $region8: #{tpu_custom_call.1} parent=1 // pred_region
      %s28 = ssub.s32 1024, 1024
      %29 = vsyncadd [#allocation7], %s28
      %s30 = sshll.u32 [#allocation6], 4
      %s31 = int_to_ptr.vmem [resolvable:$true] %s30
      %36 = dma.hbm_to_vmem [thread:$0]  %s1, 1024, %s31, [#allocation7], 128, 128, 8
    $region9: #{tpu_custom_call.1} parent=1 // pred_fallthru
      _
    // Predicated region
    $region10: #{tpu_custom_call.1} parent=1 // pred_check
      _
    $region11: #{tpu_custom_call.1} parent=1 // pred_check_branch
      %38 = sbr.rel (0) target = $region13
    $region12: #{tpu_custom_call.1} parent=1 // pred_region
      %s40 = ssub.s32 512, 512
      %41 = vsyncadd [#allocation7], %s40
      %s42 = sshll.u32 [#allocation8], 4
      %s43 = int_to_ptr.vmem [resolvable:$true] %s42
      %48 = dma.hbm_to_vmem [thread:$0]  %s2, 512, %s43, [#allocation7], 128, 128, 8
    $region13: #{tpu_custom_call.1} parent=1 // pred_fallthru
      _
    // Predicated region
    $region14: #{tpu_custom_call.1} parent=1 // pred_check
      _
    $region15: #{tpu_custom_call.1} parent=1 // pred_check_branch
      %50 = sbr.rel (0) target = $region17
    $region16: #{tpu_custom_call.1} parent=1 // pred_region
      _
    $region17: #{tpu_custom_call.1} parent=1 // pred_fallthru
      _
    // Predicated region
    $region18: #{tpu_custom_call.1} parent=1 // pred_check
      _
    $region19: #{tpu_custom_call.1} parent=1 // pred_check_branch
      %52 = sbr.rel (0) target = $region21
    $region20: #{tpu_custom_call.1} parent=1 // pred_region
      _
    $region21: #{tpu_custom_call.1} parent=1 // pred_fallthru
      _
    // Predicated region
    $region22: #{tpu_custom_call.1} parent=1 // pred_check
      _
    $region23: #{tpu_custom_call.1} parent=1 // pred_check_branch
      %54 = sbr.rel (0) target = $region25
    $region24: #{tpu_custom_call.1} parent=1 // pred_region
      %55 = dma.done [#allocation4], 1024
    $region25: #{tpu_custom_call.1} parent=1 // pred_fallthru
      _
    // Predicated region
    $region26: #{tpu_custom_call.1} parent=1 // pred_check
      _
    $region27: #{tpu_custom_call.1} parent=1 // pred_check_branch
      %57 = sbr.rel (0) target = $region29
    $region28: #{tpu_custom_call.1} parent=1 // pred_region
      %58 = dma.done [#allocation7], 1024
    $region29: #{tpu_custom_call.1} parent=1 // pred_fallthru
      _
    // Predicated region
    $region30: #{tpu_custom_call.1} parent=1 // pred_check
      _
    $region31: #{tpu_custom_call.1} parent=1 // pred_check_branch
      %60 = sbr.rel (0) target = $region33
    $region32: #{tpu_custom_call.1} parent=1 // pred_region
      %61 = dma.done [#allocation7], 512
    $region33: #{tpu_custom_call.1} parent=1 // pred_fallthru
      _
    %v62 = vld [vmem:[#allocation3] sm:$0xff]
    %v63 = vld [vmem:[#allocation3 + $0x8] sm:$0xff]
    %v64 = vld [vmem:[#allocation3 + $0x10] sm:$0xff]
    %v65 = vld [vmem:[#allocation3 + $0x18] sm:$0xff]
    %v66 = vld [vmem:[#allocation3 + $0x20] sm:$0xff]
    %v67 = vld [vmem:[#allocation3 + $0x28] sm:$0xff]
    %v68 = vld [vmem:[#allocation3 + $0x30] sm:$0xff]
    %v69 = vld [vmem:[#allocation3 + $0x38] sm:$0xff]
    %v70 = vld [vmem:[#allocation6] sm:$0xff]
    %v71 = vld [vmem:[#allocation6 + $0x8] sm:$0xff]
    %v72 = vld [vmem:[#allocation6 + $0x10] sm:$0xff]
    %v73 = vld [vmem:[#allocation6 + $0x18] sm:$0xff]
    %v74 = vld [vmem:[#allocation6 + $0x20] sm:$0xff]
    %v75 = vld [vmem:[#allocation6 + $0x28] sm:$0xff]
    %v76 = vld [vmem:[#allocation6 + $0x30] sm:$0xff]
    %v77 = vld [vmem:[#allocation6 + $0x38] sm:$0xff]
    %v78 = vld [vmem:[%s3] sm:$0x1]
    %v80 = vlaneseq
    %v81 = vshrl.u32 %v80, 7
    %v82 = vsub.s32 0, %v81
    %v83 = vrot.slane %v78, %v82
    %vm85 = vcmask 523264
    %v87 = vsel %vm85, %v62, 0
    %v90 = vsel %vm85, %v63, 0
    %v93 = vsel %vm85, %v64, 0
    %v96 = vsel %vm85, %v65, 0
    %v99 = vsel %vm85, %v66, 0
    %v102 = vsel %vm85, %v67, 0
    %v105 = vsel %vm85, %v68, 0
    %v108 = vsel %vm85, %v69, 0
    %110 = vmatprep.subr.mxu0 0.0
    %111 = vmatpush1.msra.mxu0 %v70
    %112 = vmatprep.subr.mxu0 0.0
    %113 = vmatpush1.msra.mxu0 %v71
    %114 = vmatprep.subr.mxu0 0.0
    %115 = vmatpush1.msra.mxu0 %v72
    %116 = vmatprep.subr.mxu0 0.0
    %117 = vmatpush1.msra.mxu0 %v73
    %118 = vmatprep.subr.mxu0 0.0
    %119 = vmatpush1.msra.mxu0 %v74
    %120 = vmatprep.subr.mxu0 0.0
    %121 = vmatpush1.msra.mxu0 %v75
    %122 = vmatprep.subr.mxu0 0.0
    %123 = vmatpush1.msra.mxu0 %v76
    %124 = vmatprep.subr.mxu0 0.0
    %125 = vmatpush1.msra.mxu0 %v77
    %126 = vmatprep.subr.mxu0 0.0
    %127 = vmatpush1.msra.mxu0 0.0
    %128 = vmatprep.subr.mxu0 0.0
    %129 = vmatpush1.msra.mxu0 0.0
    %130 = vmatprep.subr.mxu0 0.0
    %131 = vmatpush1.msra.mxu0 0.0
    %132 = vmatprep.subr.mxu0 0.0
    %133 = vmatpush1.msra.mxu0 0.0
    %134 = vmatprep.subr.mxu0 0.0
    %135 = vmatpush1.msra.mxu0 0.0
    %136 = vmatprep.subr.mxu0 0.0
    %137 = vmatpush1.msra.mxu0 0.0
    %138 = vmatprep.subr.mxu0 0.0
    %139 = vmatpush1.msra.mxu0 0.0
    %140 = vmatprep.subr.mxu0 0.0
    %141 = vmatpush1.msra.mxu0 0.0
    %142 = vmatprep.subr.mxu0 0.0
    %143 = vmatpush1.msra.mxu0 0.0
    %144 = vmatprep.subr.mxu0 0.0
    %145 = vmatpush1.msra.mxu0 0.0
    %146 = vmatprep.subr.mxu0 0.0
    %147 = vmatpush1.msra.mxu0 0.0
    %148 = vmatprep.subr.mxu0 0.0
    %149 = vmatpush1.msra.mxu0 0.0
    %150 = vmatprep.subr.mxu0 0.0
    %151 = vmatpush1.msra.mxu0 0.0
    %152 = vmatprep.subr.mxu0 0.0
    %153 = vmatpush1.msra.mxu0 0.0
    %154 = vmatprep.subr.mxu0 0.0
    %155 = vmatpush1.msra.mxu0 0.0
    %156 = vmatprep.subr.mxu0 0.0
    %157 = vmatpush1.msra.mxu0 0.0
    %158 = vmatprep.subr.mxu0 0.0
    %159 = vmatpush1.msra.mxu0 0.0
    %160 = vmatprep.subr.mxu0 0.0
    %161 = vmatpush1.msra.mxu0 0.0
    %162 = vmatprep.subr.mxu0 0.0
    %163 = vmatpush1.msra.mxu0 0.0
    %164 = vmatprep.subr.mxu0 0.0
    %165 = vmatpush1.msra.mxu0 0.0
    %166 = vmatprep.subr.mxu0 0.0
    %167 = vmatpush1.msra.mxu0 0.0
    %168 = vmatprep.subr.mxu0 0.0
    %169 = vmatpush1.msra.mxu0 0.0
    %170 = vmatprep.subr.mxu0 0.0
    %171 = vmatpush1.msra.mxu0 0.0
    %172 = vmatprep.subr.mxu0 0.0
    %173 = vmatpush1.msra.mxu0 0.0
    %174 = vmatprep.mubr.f32.mxu0 0.0
    %175 = vmatmul.mubr.f32.gmra.mrb[0].mxu0 %v87
    %v176 = vpop.f32.mrb[0].mxu0
    %v177 = vadd.f32 %v83, %v176
    %v178 = vpop.f32.mrb[0].mxu0
    %179 = vmatprep.mubr.f32.mxu0 0.0
    %180 = vmatmul.mubr.f32.gmra.mrb[0].mxu0 %v90
    %v181 = vpop.f32.mrb[0].mxu0
    %v182 = vadd.f32 %v83, %v181
    %v183 = vpop.f32.mrb[0].mxu0
    %184 = vmatprep.mubr.f32.mxu0 0.0
    %185 = vmatmul.mubr.f32.gmra.mrb[0].mxu0 %v93
    %v186 = vpop.f32.mrb[0].mxu0
    %v187 = vadd.f32 %v83, %v186
    %v188 = vpop.f32.mrb[0].mxu0
    %189 = vmatprep.mubr.f32.mxu0 0.0
    %190 = vmatmul.mubr.f32.gmra.mrb[0].mxu0 %v96
    %v191 = vpop.f32.mrb[0].mxu0
    %v192 = vadd.f32 %v83, %v191
    %v193 = vpop.f32.mrb[0].mxu0
    %194 = vmatprep.mubr.f32.mxu0 0.0
    %195 = vmatmul.mubr.f32.gmra.mrb[0].mxu0 %v99
    %v196 = vpop.f32.mrb[0].mxu0
    %v197 = vadd.f32 %v83, %v196
    %v198 = vpop.f32.mrb[0].mxu0
    %199 = vmatprep.mubr.f32.mxu0 0.0
    %200 = vmatmul.mubr.f32.gmra.mrb[0].mxu0 %v102
    %v201 = vpop.f32.mrb[0].mxu0
    %v202 = vadd.f32 %v83, %v201
    %v203 = vpop.f32.mrb[0].mxu0
    %204 = vmatprep.mubr.f32.mxu0 0.0
    %205 = vmatmul.mubr.f32.gmra.mrb[0].mxu0 %v105
    %v206 = vpop.f32.mrb[0].mxu0
    %v207 = vadd.f32 %v83, %v206
    %v208 = vpop.f32.mrb[0].mxu0
    %209 = vmatprep.mubr.f32.mxu0 0.0
    %210 = vmatmul.mubr.f32.gmra.mrb[0].mxu0 %v108
    %v211 = vpop.f32.mrb[0].mxu0
    %v212 = vadd.f32 %v83, %v211
    %v213 = vpop.f32.mrb[0].mxu0
    %214 = vdwg.mxu0
    %vm215 = vcmask 785408
    %216 = vst.msk [vmem:[#allocation2] sm:$0xff] %vm215, %v177
    %217 = vst.msk [vmem:[#allocation2 + $0x8] sm:$0xff] %vm215, %v182
    %218 = vst.msk [vmem:[#allocation2 + $0x10] sm:$0xff] %vm215, %v187
    %219 = vst.msk [vmem:[#allocation2 + $0x18] sm:$0xff] %vm215, %v192
    %220 = vst.msk [vmem:[#allocation2 + $0x20] sm:$0xff] %vm215, %v197
    %221 = vst.msk [vmem:[#allocation2 + $0x28] sm:$0xff] %vm215, %v202
    %222 = vst.msk [vmem:[#allocation2 + $0x30] sm:$0xff] %vm215, %v207
    %223 = vst.msk [vmem:[#allocation2 + $0x38] sm:$0xff] %vm215, %v212
    %v224 = vld [vmem:[#allocation8] sm:$0xff]
    %v225 = vld [vmem:[#allocation8 + $0x8] sm:$0xff]
    %v226 = vld [vmem:[#allocation8 + $0x10] sm:$0xff]
    %v227 = vld [vmem:[#allocation8 + $0x18] sm:$0xff]
    %v228 = vld [vmem:[%s4] sm:$0x1]
    %v230 = vlaneseq
    %v231 = vshrl.u32 %v230, 7
    %v232 = vsub.s32 0, %v231
    %v233 = vrot.slane %v228, %v232
    %v234 = vld [vmem:[#allocation2] sm:$0xff]
    %vm235 = vcmask 261120
    %v237 = vsel %vm235, 0.0, 0
    %239 = vmatprep.subr.mxu0 0.0
    %240 = vmatpush1.msra.mxu0 %v224
    %241 = vmatprep.subr.mxu0 0.0
    %242 = vmatpush1.msra.mxu0 %v225
    %243 = vmatprep.subr.mxu0 0.0
    %244 = vmatpush1.msra.mxu0 %v226
    %245 = vmatprep.subr.mxu0 0.0
    %246 = vmatpush1.msra.mxu0 %v227
    %247 = vmatprep.subr.mxu0 0.0
    %248 = vmatpush1.msra.mxu0 0.0
    %249 = vmatprep.subr.mxu0 0.0
    %250 = vmatpush1.msra.mxu0 0.0
    %251 = vmatprep.subr.mxu0 0.0
    %252 = vmatpush1.msra.mxu0 0.0
    %253 = vmatprep.subr.mxu0 0.0
    %254 = vmatpush1.msra.mxu0 0.0
    %255 = vmatprep.subr.mxu0 0.0
    %256 = vmatpush1.msra.mxu0 0.0
    %257 = vmatprep.subr.mxu0 0.0
    %258 = vmatpush1.msra.mxu0 0.0
    %259 = vmatprep.subr.mxu0 0.0
    %260 = vmatpush1.msra.mxu0 0.0
    %261 = vmatprep.subr.mxu0 0.0
    %262 = vmatpush1.msra.mxu0 0.0
    %263 = vmatprep.subr.mxu0 0.0
    %264 = vmatpush1.msra.mxu0 0.0
    %265 = vmatprep.subr.mxu0 0.0
    %266 = vmatpush1.msra.mxu0 0.0
    %267 = vmatprep.subr.mxu0 0.0
    %268 = vmatpush1.msra.mxu0 0.0
    %269 = vmatprep.subr.mxu0 0.0
    %270 = vmatpush1.msra.mxu0 0.0
    %271 = vmatprep.subr.mxu0 0.0
    %272 = vmatpush1.msra.mxu0 0.0
    %273 = vmatprep.subr.mxu0 0.0
    %274 = vmatpush1.msra.mxu0 0.0
    %275 = vmatprep.subr.mxu0 0.0
    %276 = vmatpush1.msra.mxu0 0.0
    %277 = vmatprep.subr.mxu0 0.0
    %278 = vmatpush1.msra.mxu0 0.0
    %279 = vmatprep.subr.mxu0 0.0
    %280 = vmatpush1.msra.mxu0 0.0
    %281 = vmatprep.subr.mxu0 0.0
    %282 = vmatpush1.msra.mxu0 0.0
    %283 = vmatprep.subr.mxu0 0.0
    %284 = vmatpush1.msra.mxu0 0.0
    %285 = vmatprep.subr.mxu0 0.0
    %286 = vmatpush1.msra.mxu0 0.0
    %287 = vmatprep.subr.mxu0 0.0
    %288 = vmatpush1.msra.mxu0 0.0
    %289 = vmatprep.subr.mxu0 0.0
    %290 = vmatpush1.msra.mxu0 0.0
    %291 = vmatprep.subr.mxu0 0.0
    %292 = vmatpush1.msra.mxu0 0.0
    %293 = vmatprep.subr.mxu0 0.0
    %294 = vmatpush1.msra.mxu0 0.0
    %295 = vmatprep.subr.mxu0 0.0
    %296 = vmatpush1.msra.mxu0 0.0
    %297 = vmatprep.subr.mxu0 0.0
    %298 = vmatpush1.msra.mxu0 0.0
    %299 = vmatprep.subr.mxu0 0.0
    %300 = vmatpush1.msra.mxu0 0.0
    %301 = vmatprep.subr.mxu0 0.0
    %302 = vmatpush1.msra.mxu0 0.0
    %303 = vmatprep.mubr.f32.mxu0 0.0
    %304 = vmatmul.mubr.f32.gmra.mrb[0].mxu0 %v237
    %v305 = vpop.f32.mrb[0].mxu0
    %v306 = vadd.f32 0.0, %v305
    %v307 = vpop.f32.mrb[0].mxu0
    %308 = vdwg.mxu0
    %v309 = vadd.f32 %v234, %v306
    %v310 = vxor.u32 %v309, 2147483648
    %v311 = vmul.f32 %v310, 1.442695
    %v312 = vpow.pop %v311
    %v313 = vadd.f32 %v312, 1.0
    %v314 = vrcp.pop %v313
    %v315 = vmul.f32 1.0, %v314
    %316 = vrot.lane.b32.xlu0 %v233, 64
    %v317 = vpop.permute.xlu0 %316
    %v319 = vadd.f32 %v306, %v317
    %321 = vrot.lane.b32.xlu0 %v319, 64
    %v322 = vpop.permute.xlu0 %321
    %v324 = vmul.f32 %v315, %v322
    %326 = vrot.lane.b32.xlu0 %v324, 64
    %v327 = vpop.permute.xlu0 %326
    %v329 = vadd.f32 %v234, %v327
    %v330 = vtanh.pop %v329
    %v331 = vsub.f32 1.0, %v315
    %333 = vrot.lane.b32.xlu0 %v330, 96
    %v334 = vpop.permute.xlu0 %333
    %v336 = vmul.f32 %v331, %v334
    %v337 = vmul.f32 %v315, 0.0
    %v338 = vadd.f32 %v336, %v337
    %s339 = scalar_lea.vmem [#allocation2], 8
    %v340 = vld [vmem:[%s339] sm:$0xff]
    %342 = vrot.lane.b32.xlu0 %v338, 96
    %v343 = vpop.permute.xlu0 %342
    %v344 = vsel %vm235, %v343, 0
    %346 = vmatprep.subr.mxu0 0.0
    %347 = vmatpush1.msra.mxu0 %v224
    %348 = vmatprep.subr.mxu0 0.0
    %349 = vmatpush1.msra.mxu0 %v225
    %350 = vmatprep.subr.mxu0 0.0
    %351 = vmatpush1.msra.mxu0 %v226
    %352 = vmatprep.subr.mxu0 0.0
    %353 = vmatpush1.msra.mxu0 %v227
    %354 = vmatprep.subr.mxu0 0.0
    %355 = vmatpush1.msra.mxu0 0.0
    %356 = vmatprep.subr.mxu0 0.0
    %357 = vmatpush1.msra.mxu0 0.0
    %358 = vmatprep.subr.mxu0 0.0
    %359 = vmatpush1.msra.mxu0 0.0
    %360 = vmatprep.subr.mxu0 0.0
    %361 = vmatpush1.msra.mxu0 0.0
    %362 = vmatprep.subr.mxu0 0.0
    %363 = vmatpush1.msra.mxu0 0.0
    %364 = vmatprep.subr.mxu0 0.0
    %365 = vmatpush1.msra.mxu0 0.0
    %366 = vmatprep.subr.mxu0 0.0
    %367 = vmatpush1.msra.mxu0 0.0
    %368 = vmatprep.subr.mxu0 0.0
    %369 = vmatpush1.msra.mxu0 0.0
    %370 = vmatprep.subr.mxu0 0.0
    %371 = vmatpush1.msra.mxu0 0.0
    %372 = vmatprep.subr.mxu0 0.0
    %373 = vmatpush1.msra.mxu0 0.0
    %374 = vmatprep.subr.mxu0 0.0
    %375 = vmatpush1.msra.mxu0 0.0
    %376 = vmatprep.subr.mxu0 0.0
    %377 = vmatpush1.msra.mxu0 0.0
    %378 = vmatprep.subr.mxu0 0.0
    %379 = vmatpush1.msra.mxu0 0.0
    %380 = vmatprep.subr.mxu0 0.0
    %381 = vmatpush1.msra.mxu0 0.0
    %382 = vmatprep.subr.mxu0 0.0
    %383 = vmatpush1.msra.mxu0 0.0
    %384 = vmatprep.subr.mxu0 0.0
    %385 = vmatpush1.msra.mxu0 0.0
    %386 = vmatprep.subr.mxu0 0.0
    %387 = vmatpush1.msra.mxu0 0.0
    %388 = vmatprep.subr.mxu0 0.0
    %389 = vmatpush1.msra.mxu0 0.0
    %390 = vmatprep.subr.mxu0 0.0
    %391 = vmatpush1.msra.mxu0 0.0
    %392 = vmatprep.subr.mxu0 0.0
    %393 = vmatpush1.msra.mxu0 0.0
    %394 = vmatprep.subr.mxu0 0.0
    %395 = vmatpush1.msra.mxu0 0.0
    %396 = vmatprep.subr.mxu0 0.0
    %397 = vmatpush1.msra.mxu0 0.0
    %398 = vmatprep.subr.mxu0 0.0
    %399 = vmatpush1.msra.mxu0 0.0
    %400 = vmatprep.subr.mxu0 0.0
    %401 = vmatpush1.msra.mxu0 0.0
    %402 = vmatprep.subr.mxu0 0.0
    %403 = vmatpush1.msra.mxu0 0.0
    %404 = vmatprep.subr.mxu0 0.0
    %405 = vmatpush1.msra.mxu0 0.0
    %406 = vmatprep.subr.mxu0 0.0
    %407 = vmatpush1.msra.mxu0 0.0
    %408 = vmatprep.subr.mxu0 0.0
    %409 = vmatpush1.msra.mxu0 0.0
    %410 = vmatprep.mubr.f32.mxu0 0.0
    %411 = vmatmul.mubr.f32.gmra.mrb[0].mxu0 %v344
    %v412 = vpop.f32.mrb[0].mxu0
    %v413 = vadd.f32 0.0, %v412
    %v414 = vpop.f32.mrb[0].mxu0
    %415 = vdwg.mxu0
    %v416 = vadd.f32 %v340, %v413
    %v417 = vxor.u32 %v416, 2147483648
    %v418 = vmul.f32 %v417, 1.442695
    %v419 = vpow.pop %v418
    %v420 = vadd.f32 %v419, 1.0
    %v421 = vrcp.pop %v420
    %v422 = vmul.f32 1.0, %v421
    %v423 = vadd.f32 %v413, %v317
    %425 = vrot.lane.b32.xlu0 %v423, 64
    %v426 = vpop.permute.xlu0 %425
    %v428 = vmul.f32 %v422, %v426
    %430 = vrot.lane.b32.xlu0 %v428, 64
    %v431 = vpop.permute.xlu0 %430
    %v433 = vadd.f32 %v340, %v431
    %v434 = vtanh.pop %v433
    %v435 = vsub.f32 1.0, %v422
    %437 = vrot.lane.b32.xlu0 %v434, 96
    %v438 = vpop.permute.xlu0 %437
    %v440 = vmul.f32 %v435, %v438
    %v441 = vmul.f32 %v422, %v338
    %v442 = vadd.f32 %v440, %v441
    %s443 = scalar_lea.vmem [#allocation2], 16
    %v444 = vld [vmem:[%s443] sm:$0xff]
    %446 = vrot.lane.b32.xlu0 %v442, 96
    %v447 = vpop.permute.xlu0 %446
    %v448 = vsel %vm235, %v447, 0
    %450 = vmatprep.subr.mxu0 0.0
    %451 = vmatpush1.msra.mxu0 %v224
    %452 = vmatprep.subr.mxu0 0.0
    %453 = vmatpush1.msra.mxu0 %v225
    %454 = vmatprep.subr.mxu0 0.0
    %455 = vmatpush1.msra.mxu0 %v226
    %456 = vmatprep.subr.mxu0 0.0
    %457 = vmatpush1.msra.mxu0 %v227
    %458 = vmatprep.subr.mxu0 0.0
    %459 = vmatpush1.msra.mxu0 0.0
    %460 = vmatprep.subr.mxu0 0.0
    %461 = vmatpush1.msra.mxu0 0.0
    %462 = vmatprep.subr.mxu0 0.0
    %463 = vmatpush1.msra.mxu0 0.0
    %464 = vmatprep.subr.mxu0 0.0
    %465 = vmatpush1.msra.mxu0 0.0
    %466 = vmatprep.subr.mxu0 0.0
    %467 = vmatpush1.msra.mxu0 0.0
    %468 = vmatprep.subr.mxu0 0.0
    %469 = vmatpush1.msra.mxu0 0.0
    %470 = vmatprep.subr.mxu0 0.0
    %471 = vmatpush1.msra.mxu0 0.0
    %472 = vmatprep.subr.mxu0 0.0
    %473 = vmatpush1.msra.mxu0 0.0
    %474 = vmatprep.subr.mxu0 0.0
    %475 = vmatpush1.msra.mxu0 0.0
    %476 = vmatprep.subr.mxu0 0.0
    %477 = vmatpush1.msra.mxu0 0.0
    %478 = vmatprep.subr.mxu0 0.0
    %479 = vmatpush1.msra.mxu0 0.0
    %480 = vmatprep.subr.mxu0 0.0
    %481 = vmatpush1.msra.mxu0 0.0
    %482 = vmatprep.subr.mxu0 0.0
    %483 = vmatpush1.msra.mxu0 0.0
    %484 = vmatprep.subr.mxu0 0.0
    %485 = vmatpush1.msra.mxu0 0.0
    %486 = vmatprep.subr.mxu0 0.0
    %487 = vmatpush1.msra.mxu0 0.0
    %488 = vmatprep.subr.mxu0 0.0
    %489 = vmatpush1.msra.mxu0 0.0
    %490 = vmatprep.subr.mxu0 0.0
    %491 = vmatpush1.msra.mxu0 0.0
    %492 = vmatprep.subr.mxu0 0.0
    %493 = vmatpush1.msra.mxu0 0.0
    %494 = vmatprep.subr.mxu0 0.0
    %495 = vmatpush1.msra.mxu0 0.0
    %496 = vmatprep.subr.mxu0 0.0
    %497 = vmatpush1.msra.mxu0 0.0
    %498 = vmatprep.subr.mxu0 0.0
    %499 = vmatpush1.msra.mxu0 0.0
    %500 = vmatprep.subr.mxu0 0.0
    %501 = vmatpush1.msra.mxu0 0.0
    %502 = vmatprep.subr.mxu0 0.0
    %503 = vmatpush1.msra.mxu0 0.0
    %504 = vmatprep.subr.mxu0 0.0
    %505 = vmatpush1.msra.mxu0 0.0
    %506 = vmatprep.subr.mxu0 0.0
    %507 = vmatpush1.msra.mxu0 0.0
    %508 = vmatprep.subr.mxu0 0.0
    %509 = vmatpush1.msra.mxu0 0.0
    %510 = vmatprep.subr.mxu0 0.0
    %511 = vmatpush1.msra.mxu0 0.0
    %512 = vmatprep.subr.mxu0 0.0
    %513 = vmatpush1.msra.mxu0 0.0
    %514 = vmatprep.mubr.f32.mxu0 0.0
    %515 = vmatmul.mubr.f32.gmra.mrb[0].mxu0 %v448
    %v516 = vpop.f32.mrb[0].mxu0
    %v517 = vadd.f32 0.0, %v516
    %v518 = vpop.f32.mrb[0].mxu0
    %519 = vdwg.mxu0
    %v520 = vadd.f32 %v444, %v517
    %v521 = vxor.u32 %v520, 2147483648
    %v522 = vmul.f32 %v521, 1.442695
    %v523 = vpow.pop %v522
    %v524 = vadd.f32 %v523, 1.0
    %v525 = vrcp.pop %v524
    %v526 = vmul.f32 1.0, %v525
    %v527 = vadd.f32 %v517, %v317
    %529 = vrot.lane.b32.xlu0 %v527, 64
    %v530 = vpop.permute.xlu0 %529
    %v532 = vmul.f32 %v526, %v530
    %534 = vrot.lane.b32.xlu0 %v532, 64
    %v535 = vpop.permute.xlu0 %534
    %v537 = vadd.f32 %v444, %v535
    %v538 = vtanh.pop %v537
    %v539 = vsub.f32 1.0, %v526
    %541 = vrot.lane.b32.xlu0 %v538, 96
    %v542 = vpop.permute.xlu0 %541
    %v544 = vmul.f32 %v539, %v542
    %v545 = vmul.f32 %v526, %v442
    %v546 = vadd.f32 %v544, %v545
    %s547 = scalar_lea.vmem [#allocation2], 24
    %v548 = vld [vmem:[%s547] sm:$0xff]
    %550 = vrot.lane.b32.xlu0 %v546, 96
    %v551 = vpop.permute.xlu0 %550
    %v552 = vsel %vm235, %v551, 0
    %554 = vmatprep.subr.mxu0 0.0
    %555 = vmatpush1.msra.mxu0 %v224
    %556 = vmatprep.subr.mxu0 0.0
    %557 = vmatpush1.msra.mxu0 %v225
    %558 = vmatprep.subr.mxu0 0.0
    %559 = vmatpush1.msra.mxu0 %v226
    %560 = vmatprep.subr.mxu0 0.0
    %561 = vmatpush1.msra.mxu0 %v227
    %562 = vmatprep.subr.mxu0 0.0
    %563 = vmatpush1.msra.mxu0 0.0
    %564 = vmatprep.subr.mxu0 0.0
    %565 = vmatpush1.msra.mxu0 0.0
    %566 = vmatprep.subr.mxu0 0.0
    %567 = vmatpush1.msra.mxu0 0.0
    %568 = vmatprep.subr.mxu0 0.0
    %569 = vmatpush1.msra.mxu0 0.0
    %570 = vmatprep.subr.mxu0 0.0
    %571 = vmatpush1.msra.mxu0 0.0
    %572 = vmatprep.subr.mxu0 0.0
    %573 = vmatpush1.msra.mxu0 0.0
    %574 = vmatprep.subr.mxu0 0.0
    %575 = vmatpush1.msra.mxu0 0.0
    %576 = vmatprep.subr.mxu0 0.0
    %577 = vmatpush1.msra.mxu0 0.0
    %578 = vmatprep.subr.mxu0 0.0
    %579 = vmatpush1.msra.mxu0 0.0
    %580 = vmatprep.subr.mxu0 0.0
    %581 = vmatpush1.msra.mxu0 0.0
    %582 = vmatprep.subr.mxu0 0.0
    %583 = vmatpush1.msra.mxu0 0.0
    %584 = vmatprep.subr.mxu0 0.0
    %585 = vmatpush1.msra.mxu0 0.0
    %586 = vmatprep.subr.mxu0 0.0
    %587 = vmatpush1.msra.mxu0 0.0
    %588 = vmatprep.subr.mxu0 0.0
    %589 = vmatpush1.msra.mxu0 0.0
    %590 = vmatprep.subr.mxu0 0.0
    %591 = vmatpush1.msra.mxu0 0.0
    %592 = vmatprep.subr.mxu0 0.0
    %593 = vmatpush1.msra.mxu0 0.0
    %594 = vmatprep.subr.mxu0 0.0
    %595 = vmatpush1.msra.mxu0 0.0
    %596 = vmatprep.subr.mxu0 0.0
    %597 = vmatpush1.msra.mxu0 0.0
    %598 = vmatprep.subr.mxu0 0.0
    %599 = vmatpush1.msra.mxu0 0.0
    %600 = vmatprep.subr.mxu0 0.0
    %601 = vmatpush1.msra.mxu0 0.0
    %602 = vmatprep.subr.mxu0 0.0
    %603 = vmatpush1.msra.mxu0 0.0
    %604 = vmatprep.subr.mxu0 0.0
    %605 = vmatpush1.msra.mxu0 0.0
    %606 = vmatprep.subr.mxu0 0.0
    %607 = vmatpush1.msra.mxu0 0.0
    %608 = vmatprep.subr.mxu0 0.0
    %609 = vmatpush1.msra.mxu0 0.0
    %610 = vmatprep.subr.mxu0 0.0
    %611 = vmatpush1.msra.mxu0 0.0
    %612 = vmatprep.subr.mxu0 0.0
    %613 = vmatpush1.msra.mxu0 0.0
    %614 = vmatprep.subr.mxu0 0.0
    %615 = vmatpush1.msra.mxu0 0.0
    %616 = vmatprep.subr.mxu0 0.0
    %617 = vmatpush1.msra.mxu0 0.0
    %618 = vmatprep.mubr.f32.mxu0 0.0
    %619 = vmatmul.mubr.f32.gmra.mrb[0].mxu0 %v552
    %v620 = vpop.f32.mrb[0].mxu0
    %v621 = vadd.f32 0.0, %v620
    %v622 = vpop.f32.mrb[0].mxu0
    %623 = vdwg.mxu0
    %v624 = vadd.f32 %v548, %v621
    %v625 = vxor.u32 %v624, 2147483648
    %v626 = vmul.f32 %v625, 1.442695
    %v627 = vpow.pop %v626
    %v628 = vadd.f32 %v627, 1.0
    %v629 = vrcp.pop %v628
    %v630 = vmul.f32 1.0, %v629
    %v631 = vadd.f32 %v621, %v317
    %633 = vrot.lane.b32.xlu0 %v631, 64
    %v634 = vpop.permute.xlu0 %633
    %v636 = vmul.f32 %v630, %v634
    %638 = vrot.lane.b32.xlu0 %v636, 64
    %v639 = vpop.permute.xlu0 %638
    %v641 = vadd.f32 %v548, %v639
    %v642 = vtanh.pop %v641
    %v643 = vsub.f32 1.0, %v630
    %645 = vrot.lane.b32.xlu0 %v642, 96
    %v646 = vpop.permute.xlu0 %645
    %v648 = vmul.f32 %v643, %v646
    %v649 = vmul.f32 %v630, %v546
    %v650 = vadd.f32 %v648, %v649
    %s651 = scalar_lea.vmem [#allocation2], 32
    %v652 = vld [vmem:[%s651] sm:$0xff]
    %654 = vrot.lane.b32.xlu0 %v650, 96
    %v655 = vpop.permute.xlu0 %654
    %v656 = vsel %vm235, %v655, 0
    %658 = vmatprep.subr.mxu0 0.0
    %659 = vmatpush1.msra.mxu0 %v224
    %660 = vmatprep.subr.mxu0 0.0
    %661 = vmatpush1.msra.mxu0 %v225
    %662 = vmatprep.subr.mxu0 0.0
    %663 = vmatpush1.msra.mxu0 %v226
    %664 = vmatprep.subr.mxu0 0.0
    %665 = vmatpush1.msra.mxu0 %v227
    %666 = vmatprep.subr.mxu0 0.0
    %667 = vmatpush1.msra.mxu0 0.0
    %668 = vmatprep.subr.mxu0 0.0
    %669 = vmatpush1.msra.mxu0 0.0
    %670 = vmatprep.subr.mxu0 0.0
    %671 = vmatpush1.msra.mxu0 0.0
    %672 = vmatprep.subr.mxu0 0.0
    %673 = vmatpush1.msra.mxu0 0.0
    %674 = vmatprep.subr.mxu0 0.0
    %675 = vmatpush1.msra.mxu0 0.0
    %676 = vmatprep.subr.mxu0 0.0
    %677 = vmatpush1.msra.mxu0 0.0
    %678 = vmatprep.subr.mxu0 0.0
    %679 = vmatpush1.msra.mxu0 0.0
    %680 = vmatprep.subr.mxu0 0.0
    %681 = vmatpush1.msra.mxu0 0.0
    %682 = vmatprep.subr.mxu0 0.0
    %683 = vmatpush1.msra.mxu0 0.0
    %684 = vmatprep.subr.mxu0 0.0
    %685 = vmatpush1.msra.mxu0 0.0
    %686 = vmatprep.subr.mxu0 0.0
    %687 = vmatpush1.msra.mxu0 0.0
    %688 = vmatprep.subr.mxu0 0.0
    %689 = vmatpush1.msra.mxu0 0.0
    %690 = vmatprep.subr.mxu0 0.0
    %691 = vmatpush1.msra.mxu0 0.0
    %692 = vmatprep.subr.mxu0 0.0
    %693 = vmatpush1.msra.mxu0 0.0
    %694 = vmatprep.subr.mxu0 0.0
    %695 = vmatpush1.msra.mxu0 0.0
    %696 = vmatprep.subr.mxu0 0.0
    %697 = vmatpush1.msra.mxu0 0.0
    %698 = vmatprep.subr.mxu0 0.0
    %699 = vmatpush1.msra.mxu0 0.0
    %700 = vmatprep.subr.mxu0 0.0
    %701 = vmatpush1.msra.mxu0 0.0
    %702 = vmatprep.subr.mxu0 0.0
    %703 = vmatpush1.msra.mxu0 0.0
    %704 = vmatprep.subr.mxu0 0.0
    %705 = vmatpush1.msra.mxu0 0.0
    %706 = vmatprep.subr.mxu0 0.0
    %707 = vmatpush1.msra.mxu0 0.0
    %708 = vmatprep.subr.mxu0 0.0
    %709 = vmatpush1.msra.mxu0 0.0
    %710 = vmatprep.subr.mxu0 0.0
    %711 = vmatpush1.msra.mxu0 0.0
    %712 = vmatprep.subr.mxu0 0.0
    %713 = vmatpush1.msra.mxu0 0.0
    %714 = vmatprep.subr.mxu0 0.0
    %715 = vmatpush1.msra.mxu0 0.0
    %716 = vmatprep.subr.mxu0 0.0
    %717 = vmatpush1.msra.mxu0 0.0
    %718 = vmatprep.subr.mxu0 0.0
    %719 = vmatpush1.msra.mxu0 0.0
    %720 = vmatprep.subr.mxu0 0.0
    %721 = vmatpush1.msra.mxu0 0.0
    %722 = vmatprep.mubr.f32.mxu0 0.0
    %723 = vmatmul.mubr.f32.gmra.mrb[0].mxu0 %v656
    %v724 = vpop.f32.mrb[0].mxu0
    %v725 = vadd.f32 0.0, %v724
    %v726 = vpop.f32.mrb[0].mxu0
    %727 = vdwg.mxu0
    %v728 = vadd.f32 %v652, %v725
    %v729 = vxor.u32 %v728, 2147483648
    %v730 = vmul.f32 %v729, 1.442695
    %v731 = vpow.pop %v730
    %v732 = vadd.f32 %v731, 1.0
    %v733 = vrcp.pop %v732
    %v734 = vmul.f32 1.0, %v733
    %v735 = vadd.f32 %v725, %v317
    %737 = vrot.lane.b32.xlu0 %v735, 64
    %v738 = vpop.permute.xlu0 %737
    %v740 = vmul.f32 %v734, %v738
    %742 = vrot.lane.b32.xlu0 %v740, 64
    %v743 = vpop.permute.xlu0 %742
    %v745 = vadd.f32 %v652, %v743
    %v746 = vtanh.pop %v745
    %v747 = vsub.f32 1.0, %v734
    %749 = vrot.lane.b32.xlu0 %v746, 96
    %v750 = vpop.permute.xlu0 %749
    %v752 = vmul.f32 %v747, %v750
    %v753 = vmul.f32 %v734, %v650
    %v754 = vadd.f32 %v752, %v753
    %s755 = scalar_lea.vmem [#allocation2], 40
    %v756 = vld [vmem:[%s755] sm:$0xff]
    %758 = vrot.lane.b32.xlu0 %v754, 96
    %v759 = vpop.permute.xlu0 %758
    %v760 = vsel %vm235, %v759, 0
    %762 = vmatprep.subr.mxu0 0.0
    %763 = vmatpush1.msra.mxu0 %v224
    %764 = vmatprep.subr.mxu0 0.0
    %765 = vmatpush1.msra.mxu0 %v225
    %766 = vmatprep.subr.mxu0 0.0
    %767 = vmatpush1.msra.mxu0 %v226
    %768 = vmatprep.subr.mxu0 0.0
    %769 = vmatpush1.msra.mxu0 %v227
    %770 = vmatprep.subr.mxu0 0.0
    %771 = vmatpush1.msra.mxu0 0.0
    %772 = vmatprep.subr.mxu0 0.0
    %773 = vmatpush1.msra.mxu0 0.0
    %774 = vmatprep.subr.mxu0 0.0
    %775 = vmatpush1.msra.mxu0 0.0
    %776 = vmatprep.subr.mxu0 0.0
    %777 = vmatpush1.msra.mxu0 0.0
    %778 = vmatprep.subr.mxu0 0.0
    %779 = vmatpush1.msra.mxu0 0.0
    %780 = vmatprep.subr.mxu0 0.0
    %781 = vmatpush1.msra.mxu0 0.0
    %782 = vmatprep.subr.mxu0 0.0
    %783 = vmatpush1.msra.mxu0 0.0
    %784 = vmatprep.subr.mxu0 0.0
    %785 = vmatpush1.msra.mxu0 0.0
    %786 = vmatprep.subr.mxu0 0.0
    %787 = vmatpush1.msra.mxu0 0.0
    %788 = vmatprep.subr.mxu0 0.0
    %789 = vmatpush1.msra.mxu0 0.0
    %790 = vmatprep.subr.mxu0 0.0
    %791 = vmatpush1.msra.mxu0 0.0
    %792 = vmatprep.subr.mxu0 0.0
    %793 = vmatpush1.msra.mxu0 0.0
    %794 = vmatprep.subr.mxu0 0.0
    %795 = vmatpush1.msra.mxu0 0.0
    %796 = vmatprep.subr.mxu0 0.0
    %797 = vmatpush1.msra.mxu0 0.0
    %798 = vmatprep.subr.mxu0 0.0
    %799 = vmatpush1.msra.mxu0 0.0
    %800 = vmatprep.subr.mxu0 0.0
    %801 = vmatpush1.msra.mxu0 0.0
    %802 = vmatprep.subr.mxu0 0.0
    %803 = vmatpush1.msra.mxu0 0.0
    %804 = vmatprep.subr.mxu0 0.0
    %805 = vmatpush1.msra.mxu0 0.0
    %806 = vmatprep.subr.mxu0 0.0
    %807 = vmatpush1.msra.mxu0 0.0
    %808 = vmatprep.subr.mxu0 0.0
    %809 = vmatpush1.msra.mxu0 0.0
    %810 = vmatprep.subr.mxu0 0.0
    %811 = vmatpush1.msra.mxu0 0.0
    %812 = vmatprep.subr.mxu0 0.0
    %813 = vmatpush1.msra.mxu0 0.0
    %814 = vmatprep.subr.mxu0 0.0
    %815 = vmatpush1.msra.mxu0 0.0
    %816 = vmatprep.subr.mxu0 0.0
    %817 = vmatpush1.msra.mxu0 0.0
    %818 = vmatprep.subr.mxu0 0.0
    %819 = vmatpush1.msra.mxu0 0.0
    %820 = vmatprep.subr.mxu0 0.0
    %821 = vmatpush1.msra.mxu0 0.0
    %822 = vmatprep.subr.mxu0 0.0
    %823 = vmatpush1.msra.mxu0 0.0
    %824 = vmatprep.subr.mxu0 0.0
    %825 = vmatpush1.msra.mxu0 0.0
    %826 = vmatprep.mubr.f32.mxu0 0.0
    %827 = vmatmul.mubr.f32.gmra.mrb[0].mxu0 %v760
    %v828 = vpop.f32.mrb[0].mxu0
    %v829 = vadd.f32 0.0, %v828
    %v830 = vpop.f32.mrb[0].mxu0
    %831 = vdwg.mxu0
    %v832 = vadd.f32 %v756, %v829
    %v833 = vxor.u32 %v832, 2147483648
    %v834 = vmul.f32 %v833, 1.442695
    %v835 = vpow.pop %v834
    %v836 = vadd.f32 %v835, 1.0
    %v837 = vrcp.pop %v836
    %v838 = vmul.f32 1.0, %v837
    %v839 = vadd.f32 %v829, %v317
    %841 = vrot.lane.b32.xlu0 %v839, 64
    %v842 = vpop.permute.xlu0 %841
    %v844 = vmul.f32 %v838, %v842
    %846 = vrot.lane.b32.xlu0 %v844, 64
    %v847 = vpop.permute.xlu0 %846
    %v849 = vadd.f32 %v756, %v847
    %v850 = vtanh.pop %v849
    %v851 = vsub.f32 1.0, %v838
    %853 = vrot.lane.b32.xlu0 %v850, 96
    %v854 = vpop.permute.xlu0 %853
    %v856 = vmul.f32 %v851, %v854
    %v857 = vmul.f32 %v838, %v754
    %v858 = vadd.f32 %v856, %v857
    %s859 = scalar_lea.vmem [#allocation2], 48
    %v860 = vld [vmem:[%s859] sm:$0xff]
    %862 = vrot.lane.b32.xlu0 %v858, 96
    %v863 = vpop.permute.xlu0 %862
    %v864 = vsel %vm235, %v863, 0
    %866 = vmatprep.subr.mxu0 0.0
    %867 = vmatpush1.msra.mxu0 %v224
    %868 = vmatprep.subr.mxu0 0.0
    %869 = vmatpush1.msra.mxu0 %v225
    %870 = vmatprep.subr.mxu0 0.0
    %871 = vmatpush1.msra.mxu0 %v226
    %872 = vmatprep.subr.mxu0 0.0
    %873 = vmatpush1.msra.mxu0 %v227
    %874 = vmatprep.subr.mxu0 0.0
    %875 = vmatpush1.msra.mxu0 0.0
    %876 = vmatprep.subr.mxu0 0.0
    %877 = vmatpush1.msra.mxu0 0.0
    %878 = vmatprep.subr.mxu0 0.0
    %879 = vmatpush1.msra.mxu0 0.0
    %880 = vmatprep.subr.mxu0 0.0
    %881 = vmatpush1.msra.mxu0 0.0
    %882 = vmatprep.subr.mxu0 0.0
    %883 = vmatpush1.msra.mxu0 0.0
    %884 = vmatprep.subr.mxu0 0.0
    %885 = vmatpush1.msra.mxu0 0.0
    %886 = vmatprep.subr.mxu0 0.0
    %887 = vmatpush1.msra.mxu0 0.0
    %888 = vmatprep.subr.mxu0 0.0
    %889 = vmatpush1.msra.mxu0 0.0
    %890 = vmatprep.subr.mxu0 0.0
    %891 = vmatpush1.msra.mxu0 0.0
    %892 = vmatprep.subr.mxu0 0.0
    %893 = vmatpush1.msra.mxu0 0.0
    %894 = vmatprep.subr.mxu0 0.0
    %895 = vmatpush1.msra.mxu0 0.0
    %896 = vmatprep.subr.mxu0 0.0
    %897 = vmatpush1.msra.mxu0 0.0
    %898 = vmatprep.subr.mxu0 0.0
    %899 = vmatpush1.msra.mxu0 0.0
    %900 = vmatprep.subr.mxu0 0.0
    %901 = vmatpush1.msra.mxu0 0.0
    %902 = vmatprep.subr.mxu0 0.0
    %903 = vmatpush1.msra.mxu0 0.0
    %904 = vmatprep.subr.mxu0 0.0
    %905 = vmatpush1.msra.mxu0 0.0
    %906 = vmatprep.subr.mxu0 0.0
    %907 = vmatpush1.msra.mxu0 0.0
    %908 = vmatprep.subr.mxu0 0.0
    %909 = vmatpush1.msra.mxu0 0.0
    %910 = vmatprep.subr.mxu0 0.0
    %911 = vmatpush1.msra.mxu0 0.0
    %912 = vmatprep.subr.mxu0 0.0
    %913 = vmatpush1.msra.mxu0 0.0
    %914 = vmatprep.subr.mxu0 0.0
    %915 = vmatpush1.msra.mxu0 0.0
    %916 = vmatprep.subr.mxu0 0.0
    %917 = vmatpush1.msra.mxu0 0.0
    %918 = vmatprep.subr.mxu0 0.0
    %919 = vmatpush1.msra.mxu0 0.0
    %920 = vmatprep.subr.mxu0 0.0
    %921 = vmatpush1.msra.mxu0 0.0
    %922 = vmatprep.subr.mxu0 0.0
    %923 = vmatpush1.msra.mxu0 0.0
    %924 = vmatprep.subr.mxu0 0.0
    %925 = vmatpush1.msra.mxu0 0.0
    %926 = vmatprep.subr.mxu0 0.0
    %927 = vmatpush1.msra.mxu0 0.0
    %928 = vmatprep.subr.mxu0 0.0
    %929 = vmatpush1.msra.mxu0 0.0
    %930 = vmatprep.mubr.f32.mxu0 0.0
    %931 = vmatmul.mubr.f32.gmra.mrb[0].mxu0 %v864
    %v932 = vpop.f32.mrb[0].mxu0
    %v933 = vadd.f32 0.0, %v932
    %v934 = vpop.f32.mrb[0].mxu0
    %935 = vdwg.mxu0
    %v936 = vadd.f32 %v860, %v933
    %v937 = vxor.u32 %v936, 2147483648
    %v938 = vmul.f32 %v937, 1.442695
    %v939 = vpow.pop %v938
    %v940 = vadd.f32 %v939, 1.0
    %v941 = vrcp.pop %v940
    %v942 = vmul.f32 1.0, %v941
    %v943 = vadd.f32 %v933, %v317
    %945 = vrot.lane.b32.xlu0 %v943, 64
    %v946 = vpop.permute.xlu0 %945
    %v948 = vmul.f32 %v942, %v946
    %950 = vrot.lane.b32.xlu0 %v948, 64
    %v951 = vpop.permute.xlu0 %950
    %v953 = vadd.f32 %v860, %v951
    %v954 = vtanh.pop %v953
    %v955 = vsub.f32 1.0, %v942
    %957 = vrot.lane.b32.xlu0 %v954, 96
    %v958 = vpop.permute.xlu0 %957
    %v960 = vmul.f32 %v955, %v958
    %v961 = vmul.f32 %v942, %v858
    %v962 = vadd.f32 %v960, %v961
    %s963 = scalar_lea.vmem [#allocation2], 56
    %v964 = vld [vmem:[%s963] sm:$0xff]
    %966 = vrot.lane.b32.xlu0 %v962, 96
    %v967 = vpop.permute.xlu0 %966
    %v968 = vsel %vm235, %v967, 0
    %970 = vmatprep.subr.mxu0 0.0
    %971 = vmatpush1.msra.mxu0 %v224
    %972 = vmatprep.subr.mxu0 0.0
    %973 = vmatpush1.msra.mxu0 %v225
    %974 = vmatprep.subr.mxu0 0.0
    %975 = vmatpush1.msra.mxu0 %v226
    %976 = vmatprep.subr.mxu0 0.0
    %977 = vmatpush1.msra.mxu0 %v227
    %978 = vmatprep.subr.mxu0 0.0
    %979 = vmatpush1.msra.mxu0 0.0
    %980 = vmatprep.subr.mxu0 0.0
    %981 = vmatpush1.msra.mxu0 0.0
    %982 = vmatprep.subr.mxu0 0.0
    %983 = vmatpush1.msra.mxu0 0.0
    %984 = vmatprep.subr.mxu0 0.0
    %985 = vmatpush1.msra.mxu0 0.0
    %986 = vmatprep.subr.mxu0 0.0
    %987 = vmatpush1.msra.mxu0 0.0
    %988 = vmatprep.subr.mxu0 0.0
    %989 = vmatpush1.msra.mxu0 0.0
    %990 = vmatprep.subr.mxu0 0.0
    %991 = vmatpush1.msra.mxu0 0.0
    %992 = vmatprep.subr.mxu0 0.0
    %993 = vmatpush1.msra.mxu0 0.0
    %994 = vmatprep.subr.mxu0 0.0
    %995 = vmatpush1.msra.mxu0 0.0
    %996 = vmatprep.subr.mxu0 0.0
    %997 = vmatpush1.msra.mxu0 0.0
    %998 = vmatprep.subr.mxu0 0.0
    %999 = vmatpush1.msra.mxu0 0.0
    %1000 = vmatprep.subr.mxu0 0.0
    %1001 = vmatpush1.msra.mxu0 0.0
    %1002 = vmatprep.subr.mxu0 0.0
    %1003 = vmatpush1.msra.mxu0 0.0
    %1004 = vmatprep.subr.mxu0 0.0
    %1005 = vmatpush1.msra.mxu0 0.0
    %1006 = vmatprep.subr.mxu0 0.0
    %1007 = vmatpush1.msra.mxu0 0.0
    %1008 = vmatprep.subr.mxu0 0.0
    %1009 = vmatpush1.msra.mxu0 0.0
    %1010 = vmatprep.subr.mxu0 0.0
    %1011 = vmatpush1.msra.mxu0 0.0
    %1012 = vmatprep.subr.mxu0 0.0
    %1013 = vmatpush1.msra.mxu0 0.0
    %1014 = vmatprep.subr.mxu0 0.0
    %1015 = vmatpush1.msra.mxu0 0.0
    %1016 = vmatprep.subr.mxu0 0.0
    %1017 = vmatpush1.msra.mxu0 0.0
    %1018 = vmatprep.subr.mxu0 0.0
    %1019 = vmatpush1.msra.mxu0 0.0
    %1020 = vmatprep.subr.mxu0 0.0
    %1021 = vmatpush1.msra.mxu0 0.0
    %1022 = vmatprep.subr.mxu0 0.0
    %1023 = vmatpush1.msra.mxu0 0.0
    %1024 = vmatprep.subr.mxu0 0.0
    %1025 = vmatpush1.msra.mxu0 0.0
    %1026 = vmatprep.subr.mxu0 0.0
    %1027 = vmatpush1.msra.mxu0 0.0
    %1028 = vmatprep.subr.mxu0 0.0
    %1029 = vmatpush1.msra.mxu0 0.0
    %1030 = vmatprep.subr.mxu0 0.0
    %1031 = vmatpush1.msra.mxu0 0.0
    %1032 = vmatprep.subr.mxu0 0.0
    %1033 = vmatpush1.msra.mxu0 0.0
    %1034 = vmatprep.mubr.f32.mxu0 0.0
    %1035 = vmatmul.mubr.f32.gmra.mrb[0].mxu0 %v968
    %v1036 = vpop.f32.mrb[0].mxu0
    %v1037 = vadd.f32 0.0, %v1036
    %v1038 = vpop.f32.mrb[0].mxu0
    %1039 = vdwg.mxu0
    %v1040 = vadd.f32 %v964, %v1037
    %v1041 = vxor.u32 %v1040, 2147483648
    %v1042 = vmul.f32 %v1041, 1.442695
    %v1043 = vpow.pop %v1042
    %v1044 = vadd.f32 %v1043, 1.0
    %v1045 = vrcp.pop %v1044
    %v1046 = vmul.f32 1.0, %v1045
    %v1047 = vadd.f32 %v1037, %v317
    %1049 = vrot.lane.b32.xlu0 %v1047, 64
    %v1050 = vpop.permute.xlu0 %1049
    %v1052 = vmul.f32 %v1046, %v1050
    %1054 = vrot.lane.b32.xlu0 %v1052, 64
    %v1055 = vpop.permute.xlu0 %1054
    %v1057 = vadd.f32 %v964, %v1055
    %v1058 = vtanh.pop %v1057
    %v1059 = vsub.f32 1.0, %v1046
    %1061 = vrot.lane.b32.xlu0 %v1058, 96
    %v1062 = vpop.permute.xlu0 %1061
    %v1064 = vmul.f32 %v1059, %v1062
    %v1065 = vmul.f32 %v1046, %v962
    %v1066 = vadd.f32 %v1064, %v1065
    %1068 = vrot.lane.b32.xlu0 %v1066, 96
    %v1069 = vpop.permute.xlu0 %1068
    %1071 = vst.msk [vmem:[#allocation9] sm:$0xff] %vm235, %v1069
    // Predicated region
    $region34: #{tpu_custom_call.1} parent=1 // pred_check
      _
    $region35: #{tpu_custom_call.1} parent=1 // pred_check_branch
      %1073 = sbr.rel (0) target = $region37
    $region36: #{tpu_custom_call.1} parent=1 // pred_region
      %s1075 = ssub.s32 128, 128
      %1076 = vsyncadd [#allocation5], %s1075
      %s1078 = sshll.u32 [#allocation9], 4
      %s1079 = int_to_ptr.vmem [resolvable:$true] %s1078
      %1081 = dma.vmem_to_hbm [thread:$0]  %s1079, 128, %s5, [#allocation5]
    $region37: #{tpu_custom_call.1} parent=1 // pred_fallthru
      _
    // Predicated region
    $region38: #{tpu_custom_call.1} parent=1 // pred_check
      _
    $region39: #{tpu_custom_call.1} parent=1 // pred_check_branch
      %1083 = sbr.rel (0) target = $region41
    $region40: #{tpu_custom_call.1} parent=1 // pred_region
      %1084 = dma.done [#allocation5], 128
    $region41: #{tpu_custom_call.1} parent=1 // pred_fallthru
      _
    %1085 = vsyncpa [#allocation4], 1
    %1086 = vsyncpa [#allocation7], 1
    %1087 = vsyncpa [#allocation5], 1

</llo_original>
